<compile_context>
chip_gen: v7x
topology: tpu7x:2x2x1
jax: 0.10.0
libtpu: 0.0.40
codegen_flags: <defaults>
</compile_context>

<pallas_src>
import functools

import jax
import jax.numpy as jnp
from jax.experimental import pallas as pl
from jax.experimental.pallas import tpu as pltpu


def _message_gnn_kernel(
    feat_ref,      # (TB, Mp, D)   batch block of message features
    emb_ref,       # (Mp, D)       type embeddings (grid-invariant)
    adj_ref,       # (2Mp, Mp)     [A_vc ; A_cv]   (grid-invariant)
    w1vc_top_ref,  # (D, D)        vc first layer, acts on `combined`
    w1vc_bot_ref,  # (D, D)        vc first layer, acts on vc messages
    w1cv_top_ref,  # (D, D)
    w1cv_bot_ref,  # (D, D)
    b1vc_ref,      # (1, D)
    b1cv_ref,      # (1, D)
    w2vc_ref,      # (D, D)
    w2cv_ref,      # (D, D)
    b2_ref,        # (1, D)        b2_vc + b2_cv
    out_ref,       # (TB, Mp, D)
):
    tb, m, d = feat_ref.shape
    f32 = jnp.float32

    combined = feat_ref[...] + emb_ref[...][None, :, :]          # (TB, M, D)
    combined2 = combined.reshape(tb * m, d)                      # (N, D)

    # Message aggregation: one (2M, M)@(M, D) dot per batch element in the
    # block (static unrolled loop); rows 0:M are var->check, M:2M check->var.
    adj = adj_ref[...]
    comb_agg = combined.astype(adj.dtype)                        # f32 or bf16
    vc_parts, cv_parts = [], []
    for b in range(tb):
        msgs_b = jnp.dot(adj, comb_agg[b], preferred_element_type=f32)  # (2M, D)
        vc_parts.append(msgs_b[:m])
        cv_parts.append(msgs_b[m:])
    msgs_vc = vc_parts[0] if tb == 1 else jnp.concatenate(vc_parts, axis=0)
    msgs_cv = cv_parts[0] if tb == 1 else jnp.concatenate(cv_parts, axis=0)

    # Per-path update MLPs (unpadded first-layer halves; f32 accumulation).
    pre_vc = (jnp.dot(combined2, w1vc_top_ref[...], preferred_element_type=f32)
              + jnp.dot(msgs_vc, w1vc_bot_ref[...], preferred_element_type=f32)
              + b1vc_ref[...])
    pre_cv = (jnp.dot(combined2, w1cv_top_ref[...], preferred_element_type=f32)
              + jnp.dot(msgs_cv, w1cv_bot_ref[...], preferred_element_type=f32)
              + b1cv_ref[...])
    h_vc = jnp.maximum(pre_vc, 0.0)
    h_cv = jnp.maximum(pre_cv, 0.0)

    out = (jnp.dot(h_vc, w2vc_ref[...], preferred_element_type=f32)
           + jnp.dot(h_cv, w2cv_ref[...], preferred_element_type=f32)
           + b2_ref[...])
    out_ref[...] = out.reshape(tb, m, d).astype(out_ref.dtype)


def _pick_batch_block(B, Mp, D, vmem_budget_bytes):
    """Largest divisor TB of B (capped so grid >= 2 when B > 1) whose per-step
    working set fits the VMEM budget."""
    max_tb = B if B == 1 else B // 2
    best = 1
    for tb in range(1, max_tb + 1):
        if B % tb:
            continue
        n = tb * Mp
        if n > 2048:                  # keep pipeline depth / bounded unroll
            break
        words = (
            4 * n * D                 # double-buffered feature + output blocks
            + 2 * Mp * Mp             # resident stacked adjacency (single copy)
            + Mp * D + 6 * D * D + 3 * D   # embeddings, weights, biases
            + 8 * n * D               # in-kernel intermediates (combined/msgs/pre/h)
        )
        if 4 * words <= vmem_budget_bytes:
            best = tb
    return best


@functools.partial(jax.jit, static_argnames=("aggregate_in_bf16",))
def message_gnn_layer_forward(
    message_features,        # (B, M, D)
    message_types,           # (M,) int32
    var_to_check_adjacency,  # (M, M)
    check_to_var_adjacency,  # (M, M)
    params,                  # dict of weights (PyTorch layouts)
    aggregate_in_bf16=False,
):
    B, M, D = message_features.shape
    out_dtype = message_features.dtype
    f32 = jnp.float32

    # --- message_types length fixup (mirrors the PyTorch branch; static shapes)
    mt = message_types
    if mt.shape[0] < M:
        mt = jnp.concatenate([mt, jnp.zeros((M - mt.shape[0],), mt.dtype)])
    elif mt.shape[0] > M:
        mt = mt[:M]

    # --- adjacency shape fixup (mirrors the PyTorch branch)
    def _fix_adj(a):
        if a.shape == (M, M):
            return a.astype(f32)
        fixed = jnp.zeros((M, M), f32)
        k = min(a.shape[0], M)
        return fixed.at[:k, :k].set(a[:k, :k].astype(f32))

    a_vc = _fix_adj(var_to_check_adjacency)
    a_cv = _fix_adj(check_to_var_adjacency)

    # --- type embedding gather (tiny, plain JAX)
    emb_table = params["message_type_embeddings"].astype(f32)
    safe_types = jnp.clip(mt, 0, emb_table.shape[0] - 1)
    type_emb = emb_table[safe_types]                              # (M, D)

    # --- pad message count to a sublane multiple of 8 (zero rows/cols, sliced off)
    Mp = -(-M // 8) * 8
    feats = message_features.astype(f32)
    if Mp != M:
        pad = Mp - M
        feats = jnp.pad(feats, ((0, 0), (0, pad), (0, 0)))
        type_emb = jnp.pad(type_emb, ((0, pad), (0, 0)))
        a_vc = jnp.pad(a_vc, ((0, pad), (0, pad)))
        a_cv = jnp.pad(a_cv, ((0, pad), (0, pad)))

    # Single resident adjacency operand [A_vc ; A_cv] (no kron expansion).
    agg_dtype = jnp.bfloat16 if aggregate_in_bf16 else f32
    adj = jnp.concatenate([a_vc, a_cv], axis=0).astype(agg_dtype)   # (2Mp, Mp)

    # --- weights: PyTorch Linear stores (out, in); pre-transpose / pre-split.
    w1vc = params["vc_w1"].astype(f32)                             # (D, 2D)
    w1cv = params["cv_w1"].astype(f32)
    w1vc_top, w1vc_bot = w1vc[:, :D].T, w1vc[:, D:].T              # (D, D) each
    w1cv_top, w1cv_bot = w1cv[:, :D].T, w1cv[:, D:].T
    b1vc = params["vc_b1"].astype(f32).reshape(1, D)
    b1cv = params["cv_b1"].astype(f32).reshape(1, D)
    w2vc = params["vc_w2"].astype(f32).T                           # (D, D)
    w2cv = params["cv_w2"].astype(f32).T
    b2 = (params["vc_b2"] + params["cv_b2"]).astype(f32).reshape(1, D)

    # --- per-generation VMEM budget, batch-block size, scoped VMEM limit
    try:
        vmem_cap = int(getattr(pltpu.get_tpu_info(), "vmem_capacity_bytes", 64 << 20))
    except Exception:
        vmem_cap = 64 << 20
    budget = max(8 << 20, int(vmem_cap * 0.45))
    TB = _pick_batch_block(B, Mp, D, budget)
    vmem_limit = int(max(32 << 20, min(vmem_cap * 3 // 4, 112 << 20)))

    invariant = pl.BlockSpec(memory_space=pltpu.MemorySpace.VMEM)   # single-buffered
    grid_spec = pltpu.PrefetchScalarGridSpec(
        num_scalar_prefetch=0,
        grid=(B // TB,),
        in_specs=[
            pl.BlockSpec((TB, Mp, D), lambda i: (i, 0, 0)),         # feature block
            invariant,                                              # type embeddings
            invariant,                                              # [A_vc ; A_cv]
            invariant, invariant, invariant, invariant,             # W1 pieces
            invariant, invariant,                                   # b1 vc / cv
            invariant, invariant,                                   # W2 vc / cv
            invariant,                                              # b2 (summed)
        ],
        out_specs=pl.BlockSpec((TB, Mp, D), lambda i: (i, 0, 0)),
    )

    out = pl.pallas_call(
        _message_gnn_kernel,
        out_shape=jax.ShapeDtypeStruct((B, Mp, D), out_dtype),
        grid_spec=grid_spec,
        compiler_params=pltpu.CompilerParams(
            dimension_semantics=("parallel",),   # megacore on v7x, pipelined elsewhere
            vmem_limit_bytes=vmem_limit,
        ),
    )(feats, type_emb, adj, w1vc_top, w1vc_bot, w1cv_top, w1cv_bot,
      b1vc, b1cv, w2vc, w2cv, b2)

    if Mp != M:
        out = out[:, :M, :]
    return out


def _reference_forward(message_features, message_types, a_vc, a_cv, params):
    """Pure-JAX reference mirroring the PyTorch forward, for verification."""
    emb_table = params["message_type_embeddings"]
    safe_types = jnp.clip(message_types, 0, emb_table.shape[0] - 1)
    combined = message_features + emb_table[safe_types][None]

    def mlp(x, w1, b1, w2, b2):
        h = jnp.maximum(x @ w1.T + b1, 0.0)
        return h @ w2.T + b2

    msgs_vc = jnp.einsum("mn,bnd->bmd", a_vc, combined)
    upd_vc = mlp(jnp.concatenate([combined, msgs_vc], axis=2),
                 params["vc_w1"], params["vc_b1"], params["vc_w2"], params["vc_b2"])
    msgs_cv = jnp.einsum("mn,bnd->bmd", a_cv, combined)
    upd_cv = mlp(jnp.concatenate([combined, msgs_cv], axis=2),
                 params["cv_w1"], params["cv_b1"], params["cv_w2"], params["cv_b2"])
    return upd_vc + upd_cv


if __name__ == "__main__":
    B, M, D = 2, 16, 32           # batch, num_messages, hidden_dim
    T = 4                         # num_message_types

    key = jax.random.PRNGKey(0)
    keys = jax.random.split(key, 12)

    params = {
        "message_type_embeddings": jax.random.normal(keys[0], (T, D), jnp.float32),
        # var_to_check_update: Linear(2D->D), ReLU, Linear(D->D)
        "vc_w1": jax.random.normal(keys[1], (D, 2 * D), jnp.float32) * 0.1,
        "vc_b1": jax.random.normal(keys[2], (D,), jnp.float32) * 0.1,
        "vc_w2": jax.random.normal(keys[3], (D, D), jnp.float32) * 0.1,
        "vc_b2": jax.random.normal(keys[4], (D,), jnp.float32) * 0.1,
        # check_to_var_update: Linear(2D->D), ReLU, Linear(D->D)
        "cv_w1": jax.random.normal(keys[5], (D, 2 * D), jnp.float32) * 0.1,
        "cv_b1": jax.random.normal(keys[6], (D,), jnp.float32) * 0.1,
        "cv_w2": jax.random.normal(keys[7], (D, D), jnp.float32) * 0.1,
        "cv_b2": jax.random.normal(keys[8], (D,), jnp.float32) * 0.1,
    }

    message_features = jax.random.normal(keys[9], (B, M, D), jnp.float32)
    message_types = jax.random.randint(keys[10], (M,), 0, T, dtype=jnp.int32)
    adj_key_vc, adj_key_cv = jax.random.split(keys[11])
    var_to_check_adjacency = (
        jax.random.uniform(adj_key_vc, (M, M)) < 0.3
    ).astype(jnp.float32)
    check_to_var_adjacency = (
        jax.random.uniform(adj_key_cv, (M, M)) < 0.3
    ).astype(jnp.float32)

    out = message_gnn_layer_forward(
        message_features,
        message_types,
        var_to_check_adjacency,
        check_to_var_adjacency,
        params,
    )
    out = jax.block_until_ready(out)

    ref = _reference_forward(
        message_features, message_types,
        var_to_check_adjacency, check_to_var_adjacency, params,
    )
    assert out.shape == (B, M, D)
    assert jnp.allclose(out, ref, atol=1e-4, rtol=1e-4), "mismatch vs reference"

    print("KERNEL_OK")
</pallas_src>

<mosaic_0001>
module attributes {stable_mosaic.version = 11 : i64} {
  func.func @_message_gnn_kernel(%arg0: i32, %arg1: memref<1x16x32xf32, #tpu.memory_space<vmem>>, %arg2: memref<16x32xf32, #tpu.memory_space<vmem>>, %arg3: memref<32x16xf32, #tpu.memory_space<vmem>>, %arg4: memref<32x32xf32, #tpu.memory_space<vmem>>, %arg5: memref<32x32xf32, #tpu.memory_space<vmem>>, %arg6: memref<32x32xf32, #tpu.memory_space<vmem>>, %arg7: memref<32x32xf32, #tpu.memory_space<vmem>>, %arg8: memref<1x32xf32, #tpu.memory_space<vmem>>, %arg9: memref<1x32xf32, #tpu.memory_space<vmem>>, %arg10: memref<32x32xf32, #tpu.memory_space<vmem>>, %arg11: memref<32x32xf32, #tpu.memory_space<vmem>>, %arg12: memref<1x32xf32, #tpu.memory_space<vmem>>, %arg13: memref<1x16x32xf32, #tpu.memory_space<vmem>>) attributes {dimension_semantics = [#tpu.dimension_semantics<parallel>], iteration_bounds = array<i64: 2>, scalar_prefetch = 0 : i64, scratch_operands = 0 : i64, tpu.core_type = #tpu.core_type<tc>, window_params = [{transform_indices = @transform_0, window_bounds = array<i64: 1, 16, 32>}, {pipeline_mode = #tpu.pipeline_mode<synchronous>, transform_indices = @transform_1, window_bounds = array<i64: 16, 32>}, {pipeline_mode = #tpu.pipeline_mode<synchronous>, transform_indices = @transform_2, window_bounds = array<i64: 32, 16>}, {pipeline_mode = #tpu.pipeline_mode<synchronous>, transform_indices = @transform_3, window_bounds = array<i64: 32, 32>}, {pipeline_mode = #tpu.pipeline_mode<synchronous>, transform_indices = @transform_4, window_bounds = array<i64: 32, 32>}, {pipeline_mode = #tpu.pipeline_mode<synchronous>, transform_indices = @transform_5, window_bounds = array<i64: 32, 32>}, {pipeline_mode = #tpu.pipeline_mode<synchronous>, transform_indices = @transform_6, window_bounds = array<i64: 32, 32>}, {pipeline_mode = #tpu.pipeline_mode<synchronous>, transform_indices = @transform_7, window_bounds = array<i64: 1, 32>}, {pipeline_mode = #tpu.pipeline_mode<synchronous>, transform_indices = @transform_8, window_bounds = array<i64: 1, 32>}, {pipeline_mode = #tpu.pipeline_mode<synchronous>, transform_indices = @transform_9, window_bounds = array<i64: 32, 32>}, {pipeline_mode = #tpu.pipeline_mode<synchronous>, transform_indices = @transform_10, window_bounds = array<i64: 32, 32>}, {pipeline_mode = #tpu.pipeline_mode<synchronous>, transform_indices = @transform_11, window_bounds = array<i64: 1, 32>}, {transform_indices = @transform_12, window_bounds = array<i64: 1, 16, 32>}]} {
    %c0 = arith.constant 0 : index
    %c0_0 = arith.constant 0 : index
    %c0_1 = arith.constant 0 : index
    %0 = vector.load %arg1[%c0, %c0_0, %c0_1] : memref<1x16x32xf32, #tpu.memory_space<vmem>>, vector<1x16x32xf32>
    %c0_2 = arith.constant 0 : index
    %c0_3 = arith.constant 0 : index
    %1 = vector.load %arg2[%c0_2, %c0_3] : memref<16x32xf32, #tpu.memory_space<vmem>>, vector<16x32xf32>
    %2 = vector.shape_cast %1 : vector<16x32xf32> to vector<1x16x32xf32>
    %3 = arith.addf %0, %2 : vector<1x16x32xf32>
    %4 = vector.shape_cast %3 : vector<1x16x32xf32> to vector<16x32xf32>
    %c0_4 = arith.constant 0 : index
    %c0_5 = arith.constant 0 : index
    %5 = vector.load %arg3[%c0_4, %c0_5] : memref<32x16xf32, #tpu.memory_space<vmem>>, vector<32x16xf32>
    %6 = vector.shape_cast %3 : vector<1x16x32xf32> to vector<16x32xf32>
    %cst = arith.constant dense<0.000000e+00> : vector<32x32xf32>
    %7 = tpu.matmul %5, %6, %cst {dimension_numbers = #tpu.dot_dimension_numbers<[1], [0], [0], [1], [0, 0, 1, 1], [], []>} : vector<32x16xf32>, vector<16x32xf32>, vector<32x32xf32> -> vector<32x32xf32>
    %8 = vector.extract_strided_slice %7 {offsets = [0, 0], sizes = [16, 32], strides = [1, 1]} : vector<32x32xf32> to vector<16x32xf32>
    %9 = vector.extract_strided_slice %7 {offsets = [16, 0], sizes = [16, 32], strides = [1, 1]} : vector<32x32xf32> to vector<16x32xf32>
    %c0_6 = arith.constant 0 : index
    %c0_7 = arith.constant 0 : index
    %10 = vector.load %arg4[%c0_6, %c0_7] : memref<32x32xf32, #tpu.memory_space<vmem>>, vector<32x32xf32>
    %cst_8 = arith.constant dense<0.000000e+00> : vector<16x32xf32>
    %11 = tpu.matmul %4, %10, %cst_8 {dimension_numbers = #tpu.dot_dimension_numbers<[1], [0], [0], [1], [0, 0, 1, 1], [], []>} : vector<16x32xf32>, vector<32x32xf32>, vector<16x32xf32> -> vector<16x32xf32>
    %c0_9 = arith.constant 0 : index
    %c0_10 = arith.constant 0 : index
    %12 = vector.load %arg5[%c0_9, %c0_10] : memref<32x32xf32, #tpu.memory_space<vmem>>, vector<32x32xf32>
    %cst_11 = arith.constant dense<0.000000e+00> : vector<16x32xf32>
    %13 = tpu.matmul %8, %12, %cst_11 {dimension_numbers = #tpu.dot_dimension_numbers<[1], [0], [0], [1], [0, 0, 1, 1], [], []>} : vector<16x32xf32>, vector<32x32xf32>, vector<16x32xf32> -> vector<16x32xf32>
    %14 = arith.addf %11, %13 : vector<16x32xf32>
    %c0_12 = arith.constant 0 : index
    %c0_13 = arith.constant 0 : index
    %15 = vector.load %arg8[%c0_12, %c0_13] : memref<1x32xf32, #tpu.memory_space<vmem>>, vector<1x32xf32>
    %16 = vector.broadcast %15 : vector<1x32xf32> to vector<16x32xf32>
    %17 = arith.addf %14, %16 : vector<16x32xf32>
    %c0_14 = arith.constant 0 : index
    %c0_15 = arith.constant 0 : index
    %18 = vector.load %arg6[%c0_14, %c0_15] : memref<32x32xf32, #tpu.memory_space<vmem>>, vector<32x32xf32>
    %cst_16 = arith.constant dense<0.000000e+00> : vector<16x32xf32>
    %19 = tpu.matmul %4, %18, %cst_16 {dimension_numbers = #tpu.dot_dimension_numbers<[1], [0], [0], [1], [0, 0, 1, 1], [], []>} : vector<16x32xf32>, vector<32x32xf32>, vector<16x32xf32> -> vector<16x32xf32>
    %c0_17 = arith.constant 0 : index
    %c0_18 = arith.constant 0 : index
    %20 = vector.load %arg7[%c0_17, %c0_18] : memref<32x32xf32, #tpu.memory_space<vmem>>, vector<32x32xf32>
    %cst_19 = arith.constant dense<0.000000e+00> : vector<16x32xf32>
    %21 = tpu.matmul %9, %20, %cst_19 {dimension_numbers = #tpu.dot_dimension_numbers<[1], [0], [0], [1], [0, 0, 1, 1], [], []>} : vector<16x32xf32>, vector<32x32xf32>, vector<16x32xf32> -> vector<16x32xf32>
    %22 = arith.addf %19, %21 : vector<16x32xf32>
    %c0_20 = arith.constant 0 : index
    %c0_21 = arith.constant 0 : index
    %23 = vector.load %arg9[%c0_20, %c0_21] : memref<1x32xf32, #tpu.memory_space<vmem>>, vector<1x32xf32>
    %24 = vector.broadcast %23 : vector<1x32xf32> to vector<16x32xf32>
    %25 = arith.addf %22, %24 : vector<16x32xf32>
    %cst_22 = arith.constant 0.000000e+00 : f32
    %26 = vector.broadcast %cst_22 : f32 to vector<16x32xf32>
    %27 = arith.maximumf %17, %26 : vector<16x32xf32>
    %cst_23 = arith.constant 0.000000e+00 : f32
    %28 = vector.broadcast %cst_23 : f32 to vector<16x32xf32>
    %29 = arith.maximumf %25, %28 : vector<16x32xf32>
    %c0_24 = arith.constant 0 : index
    %c0_25 = arith.constant 0 : index
    %30 = vector.load %arg10[%c0_24, %c0_25] : memref<32x32xf32, #tpu.memory_space<vmem>>, vector<32x32xf32>
    %cst_26 = arith.constant dense<0.000000e+00> : vector<16x32xf32>
    %31 = tpu.matmul %27, %30, %cst_26 {dimension_numbers = #tpu.dot_dimension_numbers<[1], [0], [0], [1], [0, 0, 1, 1], [], []>} : vector<16x32xf32>, vector<32x32xf32>, vector<16x32xf32> -> vector<16x32xf32>
    %c0_27 = arith.constant 0 : index
    %c0_28 = arith.constant 0 : index
    %32 = vector.load %arg11[%c0_27, %c0_28] : memref<32x32xf32, #tpu.memory_space<vmem>>, vector<32x32xf32>
    %cst_29 = arith.constant dense<0.000000e+00> : vector<16x32xf32>
    %33 = tpu.matmul %29, %32, %cst_29 {dimension_numbers = #tpu.dot_dimension_numbers<[1], [0], [0], [1], [0, 0, 1, 1], [], []>} : vector<16x32xf32>, vector<32x32xf32>, vector<16x32xf32> -> vector<16x32xf32>
    %34 = arith.addf %31, %33 : vector<16x32xf32>
    %c0_30 = arith.constant 0 : index
    %c0_31 = arith.constant 0 : index
    %35 = vector.load %arg12[%c0_30, %c0_31] : memref<1x32xf32, #tpu.memory_space<vmem>>, vector<1x32xf32>
    %36 = vector.broadcast %35 : vector<1x32xf32> to vector<16x32xf32>
    %37 = arith.addf %34, %36 : vector<16x32xf32>
    %38 = vector.shape_cast %37 : vector<16x32xf32> to vector<1x16x32xf32>
    %c0_32 = arith.constant 0 : index
    %c0_33 = arith.constant 0 : index
    %c0_34 = arith.constant 0 : index
    %39 = vector.load %arg13[%c0_32, %c0_33, %c0_34] : memref<1x16x32xf32, #tpu.memory_space<vmem>>, vector<1x16x32xf32>
    tpu.vector_store %arg13[%c0_32, %c0_33, %c0_34], %38 {strides = array<i32>} : memref<1x16x32xf32, #tpu.memory_space<vmem>>, vector<1x16x32xf32>,
    return
  }
  func.func @transform_0(%arg0: i32) -> (i32, i32, i32) {
    %c0_i32 = arith.constant 0 : i32
    %c0_i32_0 = arith.constant 0 : i32
    %c0_i32_1 = arith.constant 0 : i32
    return %arg0, %c0_i32, %c0_i32_0 : i32, i32, i32
  }
  func.func @transform_1(%arg0: i32) -> (i32, i32) {
    %c0_i32 = arith.constant 0 : i32
    %c0_i32_0 = arith.constant 0 : i32
    %c0_i32_1 = arith.constant 0 : i32
    return %c0_i32, %c0_i32_0 : i32, i32
  }
  func.func @transform_2(%arg0: i32) -> (i32, i32) {
    %c0_i32 = arith.constant 0 : i32
    %c0_i32_0 = arith.constant 0 : i32
    %c0_i32_1 = arith.constant 0 : i32
    return %c0_i32, %c0_i32_0 : i32, i32
  }
  func.func @transform_3(%arg0: i32) -> (i32, i32) {
    %c0_i32 = arith.constant 0 : i32
    %c0_i32_0 = arith.constant 0 : i32
    %c0_i32_1 = arith.constant 0 : i32
    return %c0_i32, %c0_i32_0 : i32, i32
  }
  func.func @transform_4(%arg0: i32) -> (i32, i32) {
    %c0_i32 = arith.constant 0 : i32
    %c0_i32_0 = arith.constant 0 : i32
    %c0_i32_1 = arith.constant 0 : i32
    return %c0_i32, %c0_i32_0 : i32, i32
  }
  func.func @transform_5(%arg0: i32) -> (i32, i32) {
    %c0_i32 = arith.constant 0 : i32
    %c0_i32_0 = arith.constant 0 : i32
    %c0_i32_1 = arith.constant 0 : i32
    return %c0_i32, %c0_i32_0 : i32, i32
  }
  func.func @transform_6(%arg0: i32) -> (i32, i32) {
    %c0_i32 = arith.constant 0 : i32
    %c0_i32_0 = arith.constant 0 : i32
    %c0_i32_1 = arith.constant 0 : i32
    return %c0_i32, %c0_i32_0 : i32, i32
  }
  func.func @transform_7(%arg0: i32) -> (i32, i32) {
    %c0_i32 = arith.constant 0 : i32
    %c0_i32_0 = arith.constant 0 : i32
    %c0_i32_1 = arith.constant 0 : i32
    return %c0_i32, %c0_i32_0 : i32, i32
  }
  func.func @transform_8(%arg0: i32) -> (i32, i32) {
    %c0_i32 = arith.constant 0 : i32
    %c0_i32_0 = arith.constant 0 : i32
    %c0_i32_1 = arith.constant 0 : i32
    return %c0_i32, %c0_i32_0 : i32, i32
  }
  func.func @transform_9(%arg0: i32) -> (i32, i32) {
    %c0_i32 = arith.constant 0 : i32
    %c0_i32_0 = arith.constant 0 : i32
    %c0_i32_1 = arith.constant 0 : i32
    return %c0_i32, %c0_i32_0 : i32, i32
  }
  func.func @transform_10(%arg0: i32) -> (i32, i32) {
    %c0_i32 = arith.constant 0 : i32
    %c0_i32_0 = arith.constant 0 : i32
    %c0_i32_1 = arith.constant 0 : i32
    return %c0_i32, %c0_i32_0 : i32, i32
  }
  func.func @transform_11(%arg0: i32) -> (i32, i32) {
    %c0_i32 = arith.constant 0 : i32
    %c0_i32_0 = arith.constant 0 : i32
    %c0_i32_1 = arith.constant 0 : i32
    return %c0_i32, %c0_i32_0 : i32, i32
  }
  func.func @transform_12(%arg0: i32) -> (i32, i32, i32) {
    %c0_i32 = arith.constant 0 : i32
    %c0_i32_0 = arith.constant 0 : i32
    %c0_i32_1 = arith.constant 0 : i32
    return %arg0, %c0_i32, %c0_i32_0 : i32, i32, i32
  }
}

</mosaic_0001>

<llo_original>
// kernel: message_gnn_layer_forward.1
$region0: #{message_gnn_layer_forward.1}
  #allocation0 [shape = 'u32[]', space=smem, size = 0x4, offset = 0x4, fixed_abs, tag = 'smem constant byte address 0x4 - core index']
  #allocation1 [shape = 'u32[144,128]{1,0:T(1,128)}', space=vmem, size = 0x12000, scoped, tag = 'internal scratch']
  %s0 = inlined_call_operand.vmem [shape: f32[2,16,32], index: 0, kind: input, shape index: {}]
  %s1 = inlined_call_operand.vmem [shape: f32[16,32], index: 1, kind: input, shape index: {}]
  %s2 = inlined_call_operand.vmem [shape: f32[32,16], index: 2, kind: input, shape index: {}]
  %s3 = inlined_call_operand.vmem [shape: f32[32,32], index: 3, kind: input, shape index: {}]
  %s4 = inlined_call_operand.vmem [shape: f32[32,32], index: 4, kind: input, shape index: {}]
  %s5 = inlined_call_operand.vmem [shape: f32[32,32], index: 5, kind: input, shape index: {}]
  %s6 = inlined_call_operand.vmem [shape: f32[32,32], index: 6, kind: input, shape index: {}]
  %s7 = inlined_call_operand.vmem [shape: f32[1,32], index: 7, kind: input, shape index: {}]
  %s8 = inlined_call_operand.vmem [shape: f32[1,32], index: 8, kind: input, shape index: {}]
  %s9 = inlined_call_operand.vmem [shape: f32[32,32], index: 9, kind: input, shape index: {}]
  %s10 = inlined_call_operand.vmem [shape: f32[32,32], index: 10, kind: input, shape index: {}]
  %s11 = inlined_call_operand.vmem [shape: f32[1,32], index: 11, kind: input, shape index: {}]
  %s12 = inlined_call_operand.hbm [shape: f32[2,16,32], index: 12, kind: output, shape index: {}]
  %s13 = sld [smem:[#allocation0]]
  $region81: #{message_gnn_layer_forward.1} parent=0
    _
  %s15 = ssub.s32 1, %s13
  %s16 = scalar_select 0, %s15, %s13
  $region1: #{message_gnn_layer_forward.1} parent=0
    #allocation2 [shape = 'u8[16384]{0}', space=vmem, size = 0x4000, scoped, tag = 'output window, operand 0']
    #allocation3 [shape = 's32[2]{0}', space=sflag, size = 0x8, scoped, tag = 'scoped memory for message_gnn_layer_forward.1']
    %17 = vsyncpa [#allocation3], 0
    %s18 = scalar_lea.sflag [#allocation3], 1
    %19 = vsyncpa %s18, 0
    loop: start=0, step=1, limit=4
    $region2: #{message_gnn_layer_forward.1} parent=1 // loop_pre_header
      _
    $region3: #{message_gnn_layer_forward.1} parent=1 // loop_header
      %s21 = sphi 0, %s25
      %p22 = scmp.ge.s32.totalorder %s21, 4
      %s31 = sphi 0, %s33
      %s34 = sphi 0, %s31
      %s35 = sphi 0, %s34
      %s51 = sphi 0, %s35
      %s55 = sphi 0, %s55
      %s57 = sphi 0, %s55
      %s58 = sphi 0, %s57
      %s72 = sphi 0, %s58
      %s76 = sphi 0, %s76
      %s78 = sphi 0, %s76
      %s79 = sphi 0, %s78
      %s93 = sphi 0, %s79
      %s97 = sphi 0, %s97
      %s99 = sphi 0, %s97
      %s100 = sphi 0, %s99
      %s114 = sphi 0, %s100
      %s118 = sphi 0, %s118
      %s120 = sphi 0, %s118
      %s121 = sphi 0, %s120
      %s135 = sphi 0, %s121
      %s139 = sphi 0, %s139
      %s141 = sphi 0, %s139
      %s142 = sphi 0, %s141
      %s156 = sphi 0, %s142
      %s160 = sphi 0, %s160
      %s162 = sphi 0, %s160
      %s163 = sphi 0, %s162
      %s177 = sphi 0, %s163
      %s181 = sphi 0, %s181
      %s183 = sphi 0, %s181
      %s184 = sphi 0, %s183
      %s198 = sphi 0, %s184
      %s202 = sphi 0, %s202
      %s204 = sphi 0, %s202
      %s205 = sphi 0, %s204
      %s219 = sphi 0, %s205
      %s223 = sphi 0, %s223
      %s225 = sphi 0, %s223
      %s226 = sphi 0, %s225
      %s240 = sphi 0, %s226
      %s244 = sphi 0, %s244
      %s246 = sphi 0, %s244
      %s247 = sphi 0, %s246
      %s261 = sphi 0, %s247
      %s265 = sphi 0, %s265
      %s267 = sphi 0, %s265
      %s268 = sphi 0, %s267
      %s282 = sphi 0, %s268
      %s288 = sphi 0, %s290
      %s291 = sphi 0, %s288
      %s292 = sphi 0, %s291
      %s308 = sphi 0, %s292
    $region4: #{message_gnn_layer_forward.1} parent=1 // loop_header_branch
      %24 = sbr.rel (%p22) target = $region8
    $region5: #{message_gnn_layer_forward.1} parent=1 // loop_body
      %s26 = ssub.s32 %s21, 1
      %s27 = ssub.s32 %s21, 2
      %s28 = sadd.s32 %s21, 1
      %s29 = ssub.s32 %s21, %s28
      %p30 = scmp.eq.s32.totalorder %s29, 0
      %s32 = sadd.s32 %s31, 1
      %s33 = scalar_select %p30, %s31, %s32
      %p36 = pneg %p30
      %p37 = scmp.eq.s32.totalorder %s21, 1
      %p38 = por %p36, %p37
      %p39 = scmp.ne.s32.totalorder %s31, %s34
      %p40 = scmp.eq.s32.totalorder %s21, 0
      %p41 = por %p39, %p40
      %p42 = scmp.ne.s32.totalorder %s31, %s34
      %p43 = scmp.eq.s32.totalorder %s26, 1
      %p44 = por %p42, %p43
      %p45 = scmp.ne.s32.totalorder %s34, %s35
      %p46 = scmp.eq.s32.totalorder %s26, 0
      %p47 = por %p45, %p46
      %p48 = scmp.ne.s32.totalorder %s34, %s35
      %p49 = scmp.eq.s32.totalorder %s27, 1
      %p50 = por %p48, %p49
      %p52 = scmp.ne.s32.totalorder %s35, %s51
      %p53 = scmp.eq.s32.totalorder %s27, 0
      %p54 = por %p52, %p53
      %s56 = sadd.s32 %s55, 1
      %p59 = scmp.eq.s32.totalorder %s21, 1
      %p60 = scmp.ne.s32.totalorder %s55, %s57
      %p61 = scmp.eq.s32.totalorder %s21, 0
      %p62 = por %p60, %p61
      %p63 = scmp.ne.s32.totalorder %s55, %s57
      %p64 = scmp.eq.s32.totalorder %s26, 1
      %p65 = por %p63, %p64
      %p66 = scmp.ne.s32.totalorder %s57, %s58
      %p67 = scmp.eq.s32.totalorder %s26, 0
      %p68 = por %p66, %p67
      %p69 = scmp.ne.s32.totalorder %s57, %s58
      %p70 = scmp.eq.s32.totalorder %s27, 1
      %p71 = por %p69, %p70
      %p73 = scmp.ne.s32.totalorder %s58, %s72
      %p74 = scmp.eq.s32.totalorder %s27, 0
      %p75 = por %p73, %p74
      %s77 = sadd.s32 %s76, 1
      %p80 = scmp.eq.s32.totalorder %s21, 1
      %p81 = scmp.ne.s32.totalorder %s76, %s78
      %p82 = scmp.eq.s32.totalorder %s21, 0
      %p83 = por %p81, %p82
      %p84 = scmp.ne.s32.totalorder %s76, %s78
      %p85 = scmp.eq.s32.totalorder %s26, 1
      %p86 = por %p84, %p85
      %p87 = scmp.ne.s32.totalorder %s78, %s79
      %p88 = scmp.eq.s32.totalorder %s26, 0
      %p89 = por %p87, %p88
      %p90 = scmp.ne.s32.totalorder %s78, %s79
      %p91 = scmp.eq.s32.totalorder %s27, 1
      %p92 = por %p90, %p91
      %p94 = scmp.ne.s32.totalorder %s79, %s93
      %p95 = scmp.eq.s32.totalorder %s27, 0
      %p96 = por %p94, %p95
      %s98 = sadd.s32 %s97, 1
      %p101 = scmp.eq.s32.totalorder %s21, 1
      %p102 = scmp.ne.s32.totalorder %s97, %s99
      %p103 = scmp.eq.s32.totalorder %s21, 0
      %p104 = por %p102, %p103
      %p105 = scmp.ne.s32.totalorder %s97, %s99
      %p106 = scmp.eq.s32.totalorder %s26, 1
      %p107 = por %p105, %p106
      %p108 = scmp.ne.s32.totalorder %s99, %s100
      %p109 = scmp.eq.s32.totalorder %s26, 0
      %p110 = por %p108, %p109
      %p111 = scmp.ne.s32.totalorder %s99, %s100
      %p112 = scmp.eq.s32.totalorder %s27, 1
      %p113 = por %p111, %p112
      %p115 = scmp.ne.s32.totalorder %s100, %s114
      %p116 = scmp.eq.s32.totalorder %s27, 0
      %p117 = por %p115, %p116
      %s119 = sadd.s32 %s118, 1
      %p122 = scmp.eq.s32.totalorder %s21, 1
      %p123 = scmp.ne.s32.totalorder %s118, %s120
      %p124 = scmp.eq.s32.totalorder %s21, 0
      %p125 = por %p123, %p124
      %p126 = scmp.ne.s32.totalorder %s118, %s120
      %p127 = scmp.eq.s32.totalorder %s26, 1
      %p128 = por %p126, %p127
      %p129 = scmp.ne.s32.totalorder %s120, %s121
      %p130 = scmp.eq.s32.totalorder %s26, 0
      %p131 = por %p129, %p130
      %p132 = scmp.ne.s32.totalorder %s120, %s121
      %p133 = scmp.eq.s32.totalorder %s27, 1
      %p134 = por %p132, %p133
      %p136 = scmp.ne.s32.totalorder %s121, %s135
      %p137 = scmp.eq.s32.totalorder %s27, 0
      %p138 = por %p136, %p137
      %s140 = sadd.s32 %s139, 1
      %p143 = scmp.eq.s32.totalorder %s21, 1
      %p144 = scmp.ne.s32.totalorder %s139, %s141
      %p145 = scmp.eq.s32.totalorder %s21, 0
      %p146 = por %p144, %p145
      %p147 = scmp.ne.s32.totalorder %s139, %s141
      %p148 = scmp.eq.s32.totalorder %s26, 1
      %p149 = por %p147, %p148
      %p150 = scmp.ne.s32.totalorder %s141, %s142
      %p151 = scmp.eq.s32.totalorder %s26, 0
      %p152 = por %p150, %p151
      %p153 = scmp.ne.s32.totalorder %s141, %s142
      %p154 = scmp.eq.s32.totalorder %s27, 1
      %p155 = por %p153, %p154
      %p157 = scmp.ne.s32.totalorder %s142, %s156
      %p158 = scmp.eq.s32.totalorder %s27, 0
      %p159 = por %p157, %p158
      %s161 = sadd.s32 %s160, 1
      %p164 = scmp.eq.s32.totalorder %s21, 1
      %p165 = scmp.ne.s32.totalorder %s160, %s162
      %p166 = scmp.eq.s32.totalorder %s21, 0
      %p167 = por %p165, %p166
      %p168 = scmp.ne.s32.totalorder %s160, %s162
      %p169 = scmp.eq.s32.totalorder %s26, 1
      %p170 = por %p168, %p169
      %p171 = scmp.ne.s32.totalorder %s162, %s163
      %p172 = scmp.eq.s32.totalorder %s26, 0
      %p173 = por %p171, %p172
      %p174 = scmp.ne.s32.totalorder %s162, %s163
      %p175 = scmp.eq.s32.totalorder %s27, 1
      %p176 = por %p174, %p175
      %p178 = scmp.ne.s32.totalorder %s163, %s177
      %p179 = scmp.eq.s32.totalorder %s27, 0
      %p180 = por %p178, %p179
      %s182 = sadd.s32 %s181, 1
      %p185 = scmp.eq.s32.totalorder %s21, 1
      %p186 = scmp.ne.s32.totalorder %s181, %s183
      %p187 = scmp.eq.s32.totalorder %s21, 0
      %p188 = por %p186, %p187
      %p189 = scmp.ne.s32.totalorder %s181, %s183
      %p190 = scmp.eq.s32.totalorder %s26, 1
      %p191 = por %p189, %p190
      %p192 = scmp.ne.s32.totalorder %s183, %s184
      %p193 = scmp.eq.s32.totalorder %s26, 0
      %p194 = por %p192, %p193
      %p195 = scmp.ne.s32.totalorder %s183, %s184
      %p196 = scmp.eq.s32.totalorder %s27, 1
      %p197 = por %p195, %p196
      %p199 = scmp.ne.s32.totalorder %s184, %s198
      %p200 = scmp.eq.s32.totalorder %s27, 0
      %p201 = por %p199, %p200
      %s203 = sadd.s32 %s202, 1
      %p206 = scmp.eq.s32.totalorder %s21, 1
      %p207 = scmp.ne.s32.totalorder %s202, %s204
      %p208 = scmp.eq.s32.totalorder %s21, 0
      %p209 = por %p207, %p208
      %p210 = scmp.ne.s32.totalorder %s202, %s204
      %p211 = scmp.eq.s32.totalorder %s26, 1
      %p212 = por %p210, %p211
      %p213 = scmp.ne.s32.totalorder %s204, %s205
      %p214 = scmp.eq.s32.totalorder %s26, 0
      %p215 = por %p213, %p214
      %p216 = scmp.ne.s32.totalorder %s204, %s205
      %p217 = scmp.eq.s32.totalorder %s27, 1
      %p218 = por %p216, %p217
      %p220 = scmp.ne.s32.totalorder %s205, %s219
      %p221 = scmp.eq.s32.totalorder %s27, 0
      %p222 = por %p220, %p221
      %s224 = sadd.s32 %s223, 1
      %p227 = scmp.eq.s32.totalorder %s21, 1
      %p228 = scmp.ne.s32.totalorder %s223, %s225
      %p229 = scmp.eq.s32.totalorder %s21, 0
      %p230 = por %p228, %p229
      %p231 = scmp.ne.s32.totalorder %s223, %s225
      %p232 = scmp.eq.s32.totalorder %s26, 1
      %p233 = por %p231, %p232
      %p234 = scmp.ne.s32.totalorder %s225, %s226
      %p235 = scmp.eq.s32.totalorder %s26, 0
      %p236 = por %p234, %p235
      %p237 = scmp.ne.s32.totalorder %s225, %s226
      %p238 = scmp.eq.s32.totalorder %s27, 1
      %p239 = por %p237, %p238
      %p241 = scmp.ne.s32.totalorder %s226, %s240
      %p242 = scmp.eq.s32.totalorder %s27, 0
      %p243 = por %p241, %p242
      %s245 = sadd.s32 %s244, 1
      %p248 = scmp.eq.s32.totalorder %s21, 1
      %p249 = scmp.ne.s32.totalorder %s244, %s246
      %p250 = scmp.eq.s32.totalorder %s21, 0
      %p251 = por %p249, %p250
      %p252 = scmp.ne.s32.totalorder %s244, %s246
      %p253 = scmp.eq.s32.totalorder %s26, 1
      %p254 = por %p252, %p253
      %p255 = scmp.ne.s32.totalorder %s246, %s247
      %p256 = scmp.eq.s32.totalorder %s26, 0
      %p257 = por %p255, %p256
      %p258 = scmp.ne.s32.totalorder %s246, %s247
      %p259 = scmp.eq.s32.totalorder %s27, 1
      %p260 = por %p258, %p259
      %p262 = scmp.ne.s32.totalorder %s247, %s261
      %p263 = scmp.eq.s32.totalorder %s27, 0
      %p264 = por %p262, %p263
      %s266 = sadd.s32 %s265, 1
      %p269 = scmp.eq.s32.totalorder %s21, 1
      %p270 = scmp.ne.s32.totalorder %s265, %s267
      %p271 = scmp.eq.s32.totalorder %s21, 0
      %p272 = por %p270, %p271
      %p273 = scmp.ne.s32.totalorder %s265, %s267
      %p274 = scmp.eq.s32.totalorder %s26, 1
      %p275 = por %p273, %p274
      %p276 = scmp.ne.s32.totalorder %s267, %s268
      %p277 = scmp.eq.s32.totalorder %s26, 0
      %p278 = por %p276, %p277
      %p279 = scmp.ne.s32.totalorder %s267, %s268
      %p280 = scmp.eq.s32.totalorder %s27, 1
      %p281 = por %p279, %p280
      %p283 = scmp.ne.s32.totalorder %s268, %s282
      %p284 = scmp.eq.s32.totalorder %s27, 0
      %p285 = por %p283, %p284
      %s286 = ssub.s32 %s21, %s28
      %p287 = scmp.eq.s32.totalorder %s286, 0
      %s289 = sadd.s32 %s288, 1
      %s290 = scalar_select %p287, %s288, %s289
      %p293 = pneg %p287
      %p294 = scmp.eq.s32.totalorder %s21, 1
      %p295 = por %p293, %p294
      %p296 = scmp.ne.s32.totalorder %s288, %s291
      %p297 = scmp.eq.s32.totalorder %s21, 0
      %p298 = por %p296, %p297
      %p299 = scmp.ne.s32.totalorder %s288, %s291
      %p300 = scmp.eq.s32.totalorder %s26, 1
      %p301 = por %p299, %p300
      %p302 = scmp.ne.s32.totalorder %s291, %s292
      %p303 = scmp.eq.s32.totalorder %s26, 0
      %p304 = por %p302, %p303
      %p305 = scmp.ne.s32.totalorder %s291, %s292
      %p306 = scmp.eq.s32.totalorder %s27, 1
      %p307 = por %p305, %p306
      %p309 = scmp.ne.s32.totalorder %s292, %s308
      %p310 = scmp.eq.s32.totalorder %s27, 0
      %p311 = por %p309, %p310
      %p312 = scmp.le.s32.totalorder 1, %s21
      %p313 = scmp.lt.s32.totalorder %s21, 3
      %p314 = pnand %p312, %p313
      %p315 = pneg %p314
      // Predicated region
      $region9: #{message_gnn_layer_forward.1} parent=5 // pred_check
        _
      $region10: #{message_gnn_layer_forward.1} parent=5 // pred_check_branch
        %317 = sbr.rel (%p314) target = $region12
      $region11: #{message_gnn_layer_forward.1} parent=5 // pred_region
        %s318 = ssub.s32 %s21, 1
        // Predicated region
        $region13: #{message_gnn_layer_forward.1} parent=11 // pred_check
          %p319 = pneg %p68
        $region14: #{message_gnn_layer_forward.1} parent=11 // pred_check_branch
          %321 = sbr.rel (%p319) target = $region16
        $region15: #{message_gnn_layer_forward.1} parent=11 // pred_region
          _
        $region16: #{message_gnn_layer_forward.1} parent=11 // pred_fallthru
          _
        // Predicated region
        $region17: #{message_gnn_layer_forward.1} parent=11 // pred_check
          %p322 = pneg %p89
        $region18: #{message_gnn_layer_forward.1} parent=11 // pred_check_branch
          %324 = sbr.rel (%p322) target = $region20
        $region19: #{message_gnn_layer_forward.1} parent=11 // pred_region
          _
        $region20: #{message_gnn_layer_forward.1} parent=11 // pred_fallthru
          _
        // Predicated region
        $region21: #{message_gnn_layer_forward.1} parent=11 // pred_check
          %p325 = pneg %p110
        $region22: #{message_gnn_layer_forward.1} parent=11 // pred_check_branch
          %327 = sbr.rel (%p325) target = $region24
        $region23: #{message_gnn_layer_forward.1} parent=11 // pred_region
          _
        $region24: #{message_gnn_layer_forward.1} parent=11 // pred_fallthru
          _
        // Predicated region
        $region25: #{message_gnn_layer_forward.1} parent=11 // pred_check
          %p328 = pneg %p131
        $region26: #{message_gnn_layer_forward.1} parent=11 // pred_check_branch
          %330 = sbr.rel (%p328) target = $region28
        $region27: #{message_gnn_layer_forward.1} parent=11 // pred_region
          _
        $region28: #{message_gnn_layer_forward.1} parent=11 // pred_fallthru
          _
        // Predicated region
        $region29: #{message_gnn_layer_forward.1} parent=11 // pred_check
          %p331 = pneg %p152
        $region30: #{message_gnn_layer_forward.1} parent=11 // pred_check_branch
          %333 = sbr.rel (%p331) target = $region32
        $region31: #{message_gnn_layer_forward.1} parent=11 // pred_region
          _
        $region32: #{message_gnn_layer_forward.1} parent=11 // pred_fallthru
          _
        // Predicated region
        $region33: #{message_gnn_layer_forward.1} parent=11 // pred_check
          %p334 = pneg %p173
        $region34: #{message_gnn_layer_forward.1} parent=11 // pred_check_branch
          %336 = sbr.rel (%p334) target = $region36
        $region35: #{message_gnn_layer_forward.1} parent=11 // pred_region
          _
        $region36: #{message_gnn_layer_forward.1} parent=11 // pred_fallthru
          _
        // Predicated region
        $region37: #{message_gnn_layer_forward.1} parent=11 // pred_check
          %p337 = pneg %p194
        $region38: #{message_gnn_layer_forward.1} parent=11 // pred_check_branch
          %339 = sbr.rel (%p337) target = $region40
        $region39: #{message_gnn_layer_forward.1} parent=11 // pred_region
          _
        $region40: #{message_gnn_layer_forward.1} parent=11 // pred_fallthru
          _
        // Predicated region
        $region41: #{message_gnn_layer_forward.1} parent=11 // pred_check
          %p340 = pneg %p215
        $region42: #{message_gnn_layer_forward.1} parent=11 // pred_check_branch
          %342 = sbr.rel (%p340) target = $region44
        $region43: #{message_gnn_layer_forward.1} parent=11 // pred_region
          _
        $region44: #{message_gnn_layer_forward.1} parent=11 // pred_fallthru
          _
        // Predicated region
        $region45: #{message_gnn_layer_forward.1} parent=11 // pred_check
          %p343 = pneg %p236
        $region46: #{message_gnn_layer_forward.1} parent=11 // pred_check_branch
          %345 = sbr.rel (%p343) target = $region48
        $region47: #{message_gnn_layer_forward.1} parent=11 // pred_region
          _
        $region48: #{message_gnn_layer_forward.1} parent=11 // pred_fallthru
          _
        // Predicated region
        $region49: #{message_gnn_layer_forward.1} parent=11 // pred_check
          %p346 = pneg %p257
        $region50: #{message_gnn_layer_forward.1} parent=11 // pred_check_branch
          %348 = sbr.rel (%p346) target = $region52
        $region51: #{message_gnn_layer_forward.1} parent=11 // pred_region
          _
        $region52: #{message_gnn_layer_forward.1} parent=11 // pred_fallthru
          _
        // Predicated region
        $region53: #{message_gnn_layer_forward.1} parent=11 // pred_check
          %p349 = pneg %p278
        $region54: #{message_gnn_layer_forward.1} parent=11 // pred_check_branch
          %351 = sbr.rel (%p349) target = $region56
        $region55: #{message_gnn_layer_forward.1} parent=11 // pred_region
          _
        $region56: #{message_gnn_layer_forward.1} parent=11 // pred_fallthru
          _
      $region12: #{message_gnn_layer_forward.1} parent=5 // pred_fallthru
        _
      %p352 = scmp.lt.s32.totalorder %s21, 2
      // Predicated region
      $region57: #{message_gnn_layer_forward.1} parent=5 // pred_check
        %p353 = pneg %p352
      $region58: #{message_gnn_layer_forward.1} parent=5 // pred_check_branch
        %355 = sbr.rel (%p353) target = $region60
      $region59: #{message_gnn_layer_forward.1} parent=5 // pred_region
        // Predicated region
        $region61: #{message_gnn_layer_forward.1} parent=59 // pred_check
          %p356 = pneg %p41
        $region62: #{message_gnn_layer_forward.1} parent=59 // pred_check_branch
          %358 = sbr.rel (%p356) target = $region64
        $region63: #{message_gnn_layer_forward.1} parent=59 // pred_region
          %p359 = scmp.lt.s32.totalorder %s21, 1
          %s360 = scalar_select %p359, %s21, 1
          %s361 = smul.addr %s360, 2
          %s362 = smul.addr %s361, 8
          %s363 = scalar_lea.vmem %s0, %s362
        $region64: #{message_gnn_layer_forward.1} parent=59 // pred_fallthru
          _
      $region60: #{message_gnn_layer_forward.1} parent=5 // pred_fallthru
        _
      %p364 = scmp.le.s32.totalorder 1, %s21
      %p365 = scmp.lt.s32.totalorder %s21, 3
      %p366 = pnand %p364, %p365
      %p367 = pneg %p366
      // Predicated region
      $region65: #{message_gnn_layer_forward.1} parent=5 // pred_check
        _
      $region66: #{message_gnn_layer_forward.1} parent=5 // pred_check_branch
        %369 = sbr.rel (%p366) target = $region68
      $region67: #{message_gnn_layer_forward.1} parent=5 // pred_region
        %s370 = ssub.s32 %s21, 1
        %p371 = scmp.lt.s32.totalorder %s26, 1
        %s372 = scalar_select %p371, %s26, 1
        %s373 = smul.addr %s372, 2
        %s374 = smul.addr %s373, 8
        %s375 = scalar_lea.vmem %s0, %s374
        %p376 = pneg %p47
        %p377 = pneg %p44
        %p378 = pneg %p68
        %p379 = pneg %p65
        %p380 = pneg %p89
        %p381 = pneg %p86
        %p382 = pneg %p110
        %p383 = pneg %p107
        %p384 = pneg %p131
        %p385 = pneg %p128
        %p386 = pneg %p152
        %p387 = pneg %p149
        %p388 = pneg %p173
        %p389 = pneg %p170
        %p390 = pneg %p194
        %p391 = pneg %p191
        %p392 = pneg %p215
        %p393 = pneg %p212
        %p394 = pneg %p236
        %p395 = pneg %p233
        %p396 = pneg %p257
        %p397 = pneg %p254
        %p398 = pneg %p278
        %p399 = pneg %p275
        %p400 = pneg %p304
        %p401 = pneg %p301
        %s402 = sand.u32 %s291, 1
        %s403 = scalar_lea.sflag [#allocation3], %s402
        %s404 = sand.u32 %s291, 1
        %s405 = smul.addr %s404, 16
        %s406 = scalar_lea.vmem [#allocation2], %s405
        %p407 = scmp.lt.s32.totalorder %s26, 1
        %s408 = scalar_select %p407, %s26, 1
        %s409 = smul.addr %s408, 2
        %s410 = smul.addr %s409, 8
        %s411 = scalar_lea.vmem %s0, %s410
        %v412 = vld [vmem:[%s411] sm:$0xff]
        %v413 = vld [vmem:[%s411 + $0x8] sm:$0xff]
        %v414 = vld [vmem:[%s1] sm:$0xff]
        %v415 = vld [vmem:[%s1 + $0x8] sm:$0xff]
        %v416 = vadd.f32 %v412, %v414
        %v417 = vadd.f32 %v413, %v415
        %v418 = vld [vmem:[%s2] sm:$0xff]
        %v419 = vld [vmem:[%s2 + $0x8] sm:$0xff]
        %v420 = vld [vmem:[%s2 + $0x10] sm:$0xff]
        %v421 = vld [vmem:[%s2 + $0x18] sm:$0xff]
        %vm422 = vcmask 130048
        %v424 = vsel %vm422, %v418, 0
        %v427 = vsel %vm422, %v419, 0
        %v430 = vsel %vm422, %v420, 0
        %v433 = vsel %vm422, %v421, 0
        %435 = vmatprep.subr.mxu0 0.0
        %436 = vmatpush1.msra.mxu0 %v416
        %437 = vmatprep.subr.mxu0 0.0
        %438 = vmatpush1.msra.mxu0 %v417
        %439 = vmatprep.subr.mxu0 0.0
        %440 = vmatpush1.msra.mxu0 0.0
        %441 = vmatprep.subr.mxu0 0.0
        %442 = vmatpush1.msra.mxu0 0.0
        %443 = vmatprep.subr.mxu0 0.0
        %444 = vmatpush1.msra.mxu0 0.0
        %445 = vmatprep.subr.mxu0 0.0
        %446 = vmatpush1.msra.mxu0 0.0
        %447 = vmatprep.subr.mxu0 0.0
        %448 = vmatpush1.msra.mxu0 0.0
        %449 = vmatprep.subr.mxu0 0.0
        %450 = vmatpush1.msra.mxu0 0.0
        %451 = vmatprep.subr.mxu0 0.0
        %452 = vmatpush1.msra.mxu0 0.0
        %453 = vmatprep.subr.mxu0 0.0
        %454 = vmatpush1.msra.mxu0 0.0
        %455 = vmatprep.subr.mxu0 0.0
        %456 = vmatpush1.msra.mxu0 0.0
        %457 = vmatprep.subr.mxu0 0.0
        %458 = vmatpush1.msra.mxu0 0.0
        %459 = vmatprep.subr.mxu0 0.0
        %460 = vmatpush1.msra.mxu0 0.0
        %461 = vmatprep.subr.mxu0 0.0
        %462 = vmatpush1.msra.mxu0 0.0
        %463 = vmatprep.subr.mxu0 0.0
        %464 = vmatpush1.msra.mxu0 0.0
        %465 = vmatprep.subr.mxu0 0.0
        %466 = vmatpush1.msra.mxu0 0.0
        %467 = vmatprep.subr.mxu0 0.0
        %468 = vmatpush1.msra.mxu0 0.0
        %469 = vmatprep.subr.mxu0 0.0
        %470 = vmatpush1.msra.mxu0 0.0
        %471 = vmatprep.subr.mxu0 0.0
        %472 = vmatpush1.msra.mxu0 0.0
        %473 = vmatprep.subr.mxu0 0.0
        %474 = vmatpush1.msra.mxu0 0.0
        %475 = vmatprep.subr.mxu0 0.0
        %476 = vmatpush1.msra.mxu0 0.0
        %477 = vmatprep.subr.mxu0 0.0
        %478 = vmatpush1.msra.mxu0 0.0
        %479 = vmatprep.subr.mxu0 0.0
        %480 = vmatpush1.msra.mxu0 0.0
        %481 = vmatprep.subr.mxu0 0.0
        %482 = vmatpush1.msra.mxu0 0.0
        %483 = vmatprep.subr.mxu0 0.0
        %484 = vmatpush1.msra.mxu0 0.0
        %485 = vmatprep.subr.mxu0 0.0
        %486 = vmatpush1.msra.mxu0 0.0
        %487 = vmatprep.subr.mxu0 0.0
        %488 = vmatpush1.msra.mxu0 0.0
        %489 = vmatprep.subr.mxu0 0.0
        %490 = vmatpush1.msra.mxu0 0.0
        %491 = vmatprep.subr.mxu0 0.0
        %492 = vmatpush1.msra.mxu0 0.0
        %493 = vmatprep.subr.mxu0 0.0
        %494 = vmatpush1.msra.mxu0 0.0
        %495 = vmatprep.subr.mxu0 0.0
        %496 = vmatpush1.msra.mxu0 0.0
        %497 = vmatprep.subr.mxu0 0.0
        %498 = vmatpush1.msra.mxu0 0.0
        %499 = vmatprep.mubr.f32.mxu0 0.0
        %500 = vmatmul.mubr.f32.gmra.mrb[0].mxu0 %v424
        %v501 = vpop.f32.mrb[0].mxu0
        %v502 = vadd.f32 0.0, %v501
        %v503 = vpop.f32.mrb[0].mxu0
        %504 = vmatprep.mubr.f32.mxu0 0.0
        %505 = vmatmul.mubr.f32.gmra.mrb[0].mxu0 %v427
        %v506 = vpop.f32.mrb[0].mxu0
        %v507 = vadd.f32 0.0, %v506
        %v508 = vpop.f32.mrb[0].mxu0
        %509 = vmatprep.mubr.f32.mxu0 0.0
        %510 = vmatmul.mubr.f32.gmra.mrb[0].mxu0 %v430
        %v511 = vpop.f32.mrb[0].mxu0
        %v512 = vadd.f32 0.0, %v511
        %v513 = vpop.f32.mrb[0].mxu0
        %514 = vmatprep.mubr.f32.mxu0 0.0
        %515 = vmatmul.mubr.f32.gmra.mrb[0].mxu0 %v433
        %v516 = vpop.f32.mrb[0].mxu0
        %v517 = vadd.f32 0.0, %v516
        %v518 = vpop.f32.mrb[0].mxu0
        %519 = vdwg.mxu0
        %v520 = vld [vmem:[%s3] sm:$0xff]
        %v521 = vld [vmem:[%s3 + $0x8] sm:$0xff]
        %v522 = vld [vmem:[%s3 + $0x10] sm:$0xff]
        %v523 = vld [vmem:[%s3 + $0x18] sm:$0xff]
        %v524 = vld [vmem:[%s4] sm:$0xff]
        %v525 = vld [vmem:[%s4 + $0x8] sm:$0xff]
        %v526 = vld [vmem:[%s4 + $0x10] sm:$0xff]
        %v527 = vld [vmem:[%s4 + $0x18] sm:$0xff]
        %vm528 = vcmask 261120
        %v530 = vsel %vm528, %v502, 0
        %v533 = vsel %vm528, %v507, 0
        %535 = vmatprep.subr.mxu0 0.0
        %536 = vmatpush1.msra.mxu0 %v524
        %537 = vmatprep.subr.mxu0 0.0
        %538 = vmatpush1.msra.mxu0 %v525
        %539 = vmatprep.subr.mxu0 0.0
        %540 = vmatpush1.msra.mxu0 %v526
        %541 = vmatprep.subr.mxu0 0.0
        %542 = vmatpush1.msra.mxu0 %v527
        %543 = vmatprep.subr.mxu0 0.0
        %544 = vmatpush1.msra.mxu0 0.0
        %545 = vmatprep.subr.mxu0 0.0
        %546 = vmatpush1.msra.mxu0 0.0
        %547 = vmatprep.subr.mxu0 0.0
        %548 = vmatpush1.msra.mxu0 0.0
        %549 = vmatprep.subr.mxu0 0.0
        %550 = vmatpush1.msra.mxu0 0.0
        %551 = vmatprep.subr.mxu0 0.0
        %552 = vmatpush1.msra.mxu0 0.0
        %553 = vmatprep.subr.mxu0 0.0
        %554 = vmatpush1.msra.mxu0 0.0
        %555 = vmatprep.subr.mxu0 0.0
        %556 = vmatpush1.msra.mxu0 0.0
        %557 = vmatprep.subr.mxu0 0.0
        %558 = vmatpush1.msra.mxu0 0.0
        %559 = vmatprep.subr.mxu0 0.0
        %560 = vmatpush1.msra.mxu0 0.0
        %561 = vmatprep.subr.mxu0 0.0
        %562 = vmatpush1.msra.mxu0 0.0
        %563 = vmatprep.subr.mxu0 0.0
        %564 = vmatpush1.msra.mxu0 0.0
        %565 = vmatprep.subr.mxu0 0.0
        %566 = vmatpush1.msra.mxu0 0.0
        %567 = vmatprep.subr.mxu0 0.0
        %568 = vmatpush1.msra.mxu0 0.0
        %569 = vmatprep.subr.mxu0 0.0
        %570 = vmatpush1.msra.mxu0 0.0
        %571 = vmatprep.subr.mxu0 0.0
        %572 = vmatpush1.msra.mxu0 0.0
        %573 = vmatprep.subr.mxu0 0.0
        %574 = vmatpush1.msra.mxu0 0.0
        %575 = vmatprep.subr.mxu0 0.0
        %576 = vmatpush1.msra.mxu0 0.0
        %577 = vmatprep.subr.mxu0 0.0
        %578 = vmatpush1.msra.mxu0 0.0
        %579 = vmatprep.subr.mxu0 0.0
        %580 = vmatpush1.msra.mxu0 0.0
        %581 = vmatprep.subr.mxu0 0.0
        %582 = vmatpush1.msra.mxu0 0.0
        %583 = vmatprep.subr.mxu0 0.0
        %584 = vmatpush1.msra.mxu0 0.0
        %585 = vmatprep.subr.mxu0 0.0
        %586 = vmatpush1.msra.mxu0 0.0
        %587 = vmatprep.subr.mxu0 0.0
        %588 = vmatpush1.msra.mxu0 0.0
        %589 = vmatprep.subr.mxu0 0.0
        %590 = vmatpush1.msra.mxu0 0.0
        %591 = vmatprep.subr.mxu0 0.0
        %592 = vmatpush1.msra.mxu0 0.0
        %593 = vmatprep.subr.mxu0 0.0
        %594 = vmatpush1.msra.mxu0 0.0
        %595 = vmatprep.subr.mxu0 0.0
        %596 = vmatpush1.msra.mxu0 0.0
        %597 = vmatprep.subr.mxu0 0.0
        %598 = vmatpush1.msra.mxu0 0.0
        %599 = vmatprep.mubr.f32.mxu0 0.0
        %600 = vmatmul.mubr.f32.gmra.mrb[0].mxu0 %v530
        %v601 = vpop.f32.mrb[0].mxu0
        %v602 = vadd.f32 0.0, %v601
        %v603 = vpop.f32.mrb[0].mxu0
        %604 = vmatprep.mubr.f32.mxu0 0.0
        %605 = vmatmul.mubr.f32.gmra.mrb[0].mxu0 %v533
        %v606 = vpop.f32.mrb[0].mxu0
        %v607 = vadd.f32 0.0, %v606
        %v608 = vpop.f32.mrb[0].mxu0
        %609 = vdwg.mxu0
        %v611 = vsel %vm528, %v416, 0
        %v614 = vsel %vm528, %v417, 0
        %616 = vmatprep.subr.mxu0 0.0
        %617 = vmatpush1.msra.mxu0 %v520
        %618 = vmatprep.subr.mxu0 0.0
        %619 = vmatpush1.msra.mxu0 %v521
        %620 = vmatprep.subr.mxu0 0.0
        %621 = vmatpush1.msra.mxu0 %v522
        %622 = vmatprep.subr.mxu0 0.0
        %623 = vmatpush1.msra.mxu0 %v523
        %624 = vmatprep.subr.mxu0 0.0
        %625 = vmatpush1.msra.mxu0 0.0
        %626 = vmatprep.subr.mxu0 0.0
        %627 = vmatpush1.msra.mxu0 0.0
        %628 = vmatprep.subr.mxu0 0.0
        %629 = vmatpush1.msra.mxu0 0.0
        %630 = vmatprep.subr.mxu0 0.0
        %631 = vmatpush1.msra.mxu0 0.0
        %632 = vmatprep.subr.mxu0 0.0
        %633 = vmatpush1.msra.mxu0 0.0
        %634 = vmatprep.subr.mxu0 0.0
        %635 = vmatpush1.msra.mxu0 0.0
        %636 = vmatprep.subr.mxu0 0.0
        %637 = vmatpush1.msra.mxu0 0.0
        %638 = vmatprep.subr.mxu0 0.0
        %639 = vmatpush1.msra.mxu0 0.0
        %640 = vmatprep.subr.mxu0 0.0
        %641 = vmatpush1.msra.mxu0 0.0
        %642 = vmatprep.subr.mxu0 0.0
        %643 = vmatpush1.msra.mxu0 0.0
        %644 = vmatprep.subr.mxu0 0.0
        %645 = vmatpush1.msra.mxu0 0.0
        %646 = vmatprep.subr.mxu0 0.0
        %647 = vmatpush1.msra.mxu0 0.0
        %648 = vmatprep.subr.mxu0 0.0
        %649 = vmatpush1.msra.mxu0 0.0
        %650 = vmatprep.subr.mxu0 0.0
        %651 = vmatpush1.msra.mxu0 0.0
        %652 = vmatprep.subr.mxu0 0.0
        %653 = vmatpush1.msra.mxu0 0.0
        %654 = vmatprep.subr.mxu0 0.0
        %655 = vmatpush1.msra.mxu0 0.0
        %656 = vmatprep.subr.mxu0 0.0
        %657 = vmatpush1.msra.mxu0 0.0
        %658 = vmatprep.subr.mxu0 0.0
        %659 = vmatpush1.msra.mxu0 0.0
        %660 = vmatprep.subr.mxu0 0.0
        %661 = vmatpush1.msra.mxu0 0.0
        %662 = vmatprep.subr.mxu0 0.0
        %663 = vmatpush1.msra.mxu0 0.0
        %664 = vmatprep.subr.mxu0 0.0
        %665 = vmatpush1.msra.mxu0 0.0
        %666 = vmatprep.subr.mxu0 0.0
        %667 = vmatpush1.msra.mxu0 0.0
        %668 = vmatprep.subr.mxu0 0.0
        %669 = vmatpush1.msra.mxu0 0.0
        %670 = vmatprep.subr.mxu0 0.0
        %671 = vmatpush1.msra.mxu0 0.0
        %672 = vmatprep.subr.mxu0 0.0
        %673 = vmatpush1.msra.mxu0 0.0
        %674 = vmatprep.subr.mxu0 0.0
        %675 = vmatpush1.msra.mxu0 0.0
        %676 = vmatprep.subr.mxu0 0.0
        %677 = vmatpush1.msra.mxu0 0.0
        %678 = vmatprep.subr.mxu0 0.0
        %679 = vmatpush1.msra.mxu0 0.0
        %680 = vmatprep.mubr.f32.mxu0 0.0
        %681 = vmatmul.mubr.f32.gmra.mrb[0].mxu0 %v611
        %v682 = vpop.f32.mrb[0].mxu0
        %v683 = vadd.f32 %v602, %v682
        %v684 = vpop.f32.mrb[0].mxu0
        %685 = vmatprep.mubr.f32.mxu0 0.0
        %686 = vmatmul.mubr.f32.gmra.mrb[0].mxu0 %v614
        %v687 = vpop.f32.mrb[0].mxu0
        %v688 = vadd.f32 %v607, %v687
        %v689 = vpop.f32.mrb[0].mxu0
        %690 = vdwg.mxu0
        %v691 = vld [vmem:[%s7] sm:$0x1]
        %v693 = vlaneseq
        %v694 = vshrl.u32 %v693, 7
        %v695 = vsub.s32 0, %v694
        %v696 = vrot.slane %v691, %v695
        %v698 = vadd.f32 %v683, %v696
        %v699 = vadd.f32 %v688, %v696
        %v700 = vld [vmem:[%s5] sm:$0xff]
        %v701 = vld [vmem:[%s5 + $0x8] sm:$0xff]
        %v702 = vld [vmem:[%s5 + $0x10] sm:$0xff]
        %v703 = vld [vmem:[%s5 + $0x18] sm:$0xff]
        %v704 = vld [vmem:[%s6] sm:$0xff]
        %v705 = vld [vmem:[%s6 + $0x8] sm:$0xff]
        %v706 = vld [vmem:[%s6 + $0x10] sm:$0xff]
        %v707 = vld [vmem:[%s6 + $0x18] sm:$0xff]
        %v709 = vsel %vm528, %v512, 0
        %v712 = vsel %vm528, %v517, 0
        %714 = vmatprep.subr.mxu0 0.0
        %715 = vmatpush1.msra.mxu0 %v704
        %716 = vmatprep.subr.mxu0 0.0
        %717 = vmatpush1.msra.mxu0 %v705
        %718 = vmatprep.subr.mxu0 0.0
        %719 = vmatpush1.msra.mxu0 %v706
        %720 = vmatprep.subr.mxu0 0.0
        %721 = vmatpush1.msra.mxu0 %v707
        %722 = vmatprep.subr.mxu0 0.0
        %723 = vmatpush1.msra.mxu0 0.0
        %724 = vmatprep.subr.mxu0 0.0
        %725 = vmatpush1.msra.mxu0 0.0
        %726 = vmatprep.subr.mxu0 0.0
        %727 = vmatpush1.msra.mxu0 0.0
        %728 = vmatprep.subr.mxu0 0.0
        %729 = vmatpush1.msra.mxu0 0.0
        %730 = vmatprep.subr.mxu0 0.0
        %731 = vmatpush1.msra.mxu0 0.0
        %732 = vmatprep.subr.mxu0 0.0
        %733 = vmatpush1.msra.mxu0 0.0
        %734 = vmatprep.subr.mxu0 0.0
        %735 = vmatpush1.msra.mxu0 0.0
        %736 = vmatprep.subr.mxu0 0.0
        %737 = vmatpush1.msra.mxu0 0.0
        %738 = vmatprep.subr.mxu0 0.0
        %739 = vmatpush1.msra.mxu0 0.0
        %740 = vmatprep.subr.mxu0 0.0
        %741 = vmatpush1.msra.mxu0 0.0
        %742 = vmatprep.subr.mxu0 0.0
        %743 = vmatpush1.msra.mxu0 0.0
        %744 = vmatprep.subr.mxu0 0.0
        %745 = vmatpush1.msra.mxu0 0.0
        %746 = vmatprep.subr.mxu0 0.0
        %747 = vmatpush1.msra.mxu0 0.0
        %748 = vmatprep.subr.mxu0 0.0
        %749 = vmatpush1.msra.mxu0 0.0
        %750 = vmatprep.subr.mxu0 0.0
        %751 = vmatpush1.msra.mxu0 0.0
        %752 = vmatprep.subr.mxu0 0.0
        %753 = vmatpush1.msra.mxu0 0.0
        %754 = vmatprep.subr.mxu0 0.0
        %755 = vmatpush1.msra.mxu0 0.0
        %756 = vmatprep.subr.mxu0 0.0
        %757 = vmatpush1.msra.mxu0 0.0
        %758 = vmatprep.subr.mxu0 0.0
        %759 = vmatpush1.msra.mxu0 0.0
        %760 = vmatprep.subr.mxu0 0.0
        %761 = vmatpush1.msra.mxu0 0.0
        %762 = vmatprep.subr.mxu0 0.0
        %763 = vmatpush1.msra.mxu0 0.0
        %764 = vmatprep.subr.mxu0 0.0
        %765 = vmatpush1.msra.mxu0 0.0
        %766 = vmatprep.subr.mxu0 0.0
        %767 = vmatpush1.msra.mxu0 0.0
        %768 = vmatprep.subr.mxu0 0.0
        %769 = vmatpush1.msra.mxu0 0.0
        %770 = vmatprep.subr.mxu0 0.0
        %771 = vmatpush1.msra.mxu0 0.0
        %772 = vmatprep.subr.mxu0 0.0
        %773 = vmatpush1.msra.mxu0 0.0
        %774 = vmatprep.subr.mxu0 0.0
        %775 = vmatpush1.msra.mxu0 0.0
        %776 = vmatprep.subr.mxu0 0.0
        %777 = vmatpush1.msra.mxu0 0.0
        %778 = vmatprep.mubr.f32.mxu0 0.0
        %779 = vmatmul.mubr.f32.gmra.mrb[0].mxu0 %v709
        %v780 = vpop.f32.mrb[0].mxu0
        %v781 = vadd.f32 0.0, %v780
        %v782 = vpop.f32.mrb[0].mxu0
        %783 = vmatprep.mubr.f32.mxu0 0.0
        %784 = vmatmul.mubr.f32.gmra.mrb[0].mxu0 %v712
        %v785 = vpop.f32.mrb[0].mxu0
        %v786 = vadd.f32 0.0, %v785
        %v787 = vpop.f32.mrb[0].mxu0
        %788 = vdwg.mxu0
        %789 = vmatprep.subr.mxu0 0.0
        %790 = vmatpush1.msra.mxu0 %v700
        %791 = vmatprep.subr.mxu0 0.0
        %792 = vmatpush1.msra.mxu0 %v701
        %793 = vmatprep.subr.mxu0 0.0
        %794 = vmatpush1.msra.mxu0 %v702
        %795 = vmatprep.subr.mxu0 0.0
        %796 = vmatpush1.msra.mxu0 %v703
        %797 = vmatprep.subr.mxu0 0.0
        %798 = vmatpush1.msra.mxu0 0.0
        %799 = vmatprep.subr.mxu0 0.0
        %800 = vmatpush1.msra.mxu0 0.0
        %801 = vmatprep.subr.mxu0 0.0
        %802 = vmatpush1.msra.mxu0 0.0
        %803 = vmatprep.subr.mxu0 0.0
        %804 = vmatpush1.msra.mxu0 0.0
        %805 = vmatprep.subr.mxu0 0.0
        %806 = vmatpush1.msra.mxu0 0.0
        %807 = vmatprep.subr.mxu0 0.0
        %808 = vmatpush1.msra.mxu0 0.0
        %809 = vmatprep.subr.mxu0 0.0
        %810 = vmatpush1.msra.mxu0 0.0
        %811 = vmatprep.subr.mxu0 0.0
        %812 = vmatpush1.msra.mxu0 0.0
        %813 = vmatprep.subr.mxu0 0.0
        %814 = vmatpush1.msra.mxu0 0.0
        %815 = vmatprep.subr.mxu0 0.0
        %816 = vmatpush1.msra.mxu0 0.0
        %817 = vmatprep.subr.mxu0 0.0
        %818 = vmatpush1.msra.mxu0 0.0
        %819 = vmatprep.subr.mxu0 0.0
        %820 = vmatpush1.msra.mxu0 0.0
        %821 = vmatprep.subr.mxu0 0.0
        %822 = vmatpush1.msra.mxu0 0.0
        %823 = vmatprep.subr.mxu0 0.0
        %824 = vmatpush1.msra.mxu0 0.0
        %825 = vmatprep.subr.mxu0 0.0
        %826 = vmatpush1.msra.mxu0 0.0
        %827 = vmatprep.subr.mxu0 0.0
        %828 = vmatpush1.msra.mxu0 0.0
        %829 = vmatprep.subr.mxu0 0.0
        %830 = vmatpush1.msra.mxu0 0.0
        %831 = vmatprep.subr.mxu0 0.0
        %832 = vmatpush1.msra.mxu0 0.0
        %833 = vmatprep.subr.mxu0 0.0
        %834 = vmatpush1.msra.mxu0 0.0
        %835 = vmatprep.subr.mxu0 0.0
        %836 = vmatpush1.msra.mxu0 0.0
        %837 = vmatprep.subr.mxu0 0.0
        %838 = vmatpush1.msra.mxu0 0.0
        %839 = vmatprep.subr.mxu0 0.0
        %840 = vmatpush1.msra.mxu0 0.0
        %841 = vmatprep.subr.mxu0 0.0
        %842 = vmatpush1.msra.mxu0 0.0
        %843 = vmatprep.subr.mxu0 0.0
        %844 = vmatpush1.msra.mxu0 0.0
        %845 = vmatprep.subr.mxu0 0.0
        %846 = vmatpush1.msra.mxu0 0.0
        %847 = vmatprep.subr.mxu0 0.0
        %848 = vmatpush1.msra.mxu0 0.0
        %849 = vmatprep.subr.mxu0 0.0
        %850 = vmatpush1.msra.mxu0 0.0
        %851 = vmatprep.subr.mxu0 0.0
        %852 = vmatpush1.msra.mxu0 0.0
        %853 = vmatprep.mubr.f32.mxu0 0.0
        %854 = vmatmul.mubr.f32.gmra.mrb[0].mxu0 %v611
        %v855 = vpop.f32.mrb[0].mxu0
        %v856 = vadd.f32 %v781, %v855
        %v857 = vpop.f32.mrb[0].mxu0
        %858 = vmatprep.mubr.f32.mxu0 0.0
        %859 = vmatmul.mubr.f32.gmra.mrb[0].mxu0 %v614
        %v860 = vpop.f32.mrb[0].mxu0
        %v861 = vadd.f32 %v786, %v860
        %v862 = vpop.f32.mrb[0].mxu0
        %863 = vdwg.mxu0
        %v864 = vld [vmem:[%s8] sm:$0x1]
        %v866 = vlaneseq
        %v867 = vshrl.u32 %v866, 7
        %v868 = vsub.s32 0, %v867
        %v869 = vrot.slane %v864, %v868
        %v871 = vadd.f32 %v856, %v869
        %v872 = vadd.f32 %v861, %v869
        %v873 = vmax.f32 %v698, 0.0
        %v874 = vmax.f32 %v699, 0.0
        %v875 = vmax.f32 %v871, 0.0
        %v876 = vmax.f32 %v872, 0.0
        %v877 = vld [vmem:[%s9] sm:$0xff]
        %v878 = vld [vmem:[%s9 + $0x8] sm:$0xff]
        %v879 = vld [vmem:[%s9 + $0x10] sm:$0xff]
        %v880 = vld [vmem:[%s9 + $0x18] sm:$0xff]
        %v881 = vld [vmem:[%s10] sm:$0xff]
        %v882 = vld [vmem:[%s10 + $0x8] sm:$0xff]
        %v883 = vld [vmem:[%s10 + $0x10] sm:$0xff]
        %v884 = vld [vmem:[%s10 + $0x18] sm:$0xff]
        %v886 = vsel %vm528, %v875, 0
        %v889 = vsel %vm528, %v876, 0
        %891 = vmatprep.subr.mxu0 0.0
        %892 = vmatpush1.msra.mxu0 %v881
        %893 = vmatprep.subr.mxu0 0.0
        %894 = vmatpush1.msra.mxu0 %v882
        %895 = vmatprep.subr.mxu0 0.0
        %896 = vmatpush1.msra.mxu0 %v883
        %897 = vmatprep.subr.mxu0 0.0
        %898 = vmatpush1.msra.mxu0 %v884
        %899 = vmatprep.subr.mxu0 0.0
        %900 = vmatpush1.msra.mxu0 0.0
        %901 = vmatprep.subr.mxu0 0.0
        %902 = vmatpush1.msra.mxu0 0.0
        %903 = vmatprep.subr.mxu0 0.0
        %904 = vmatpush1.msra.mxu0 0.0
        %905 = vmatprep.subr.mxu0 0.0
        %906 = vmatpush1.msra.mxu0 0.0
        %907 = vmatprep.subr.mxu0 0.0
        %908 = vmatpush1.msra.mxu0 0.0
        %909 = vmatprep.subr.mxu0 0.0
        %910 = vmatpush1.msra.mxu0 0.0
        %911 = vmatprep.subr.mxu0 0.0
        %912 = vmatpush1.msra.mxu0 0.0
        %913 = vmatprep.subr.mxu0 0.0
        %914 = vmatpush1.msra.mxu0 0.0
        %915 = vmatprep.subr.mxu0 0.0
        %916 = vmatpush1.msra.mxu0 0.0
        %917 = vmatprep.subr.mxu0 0.0
        %918 = vmatpush1.msra.mxu0 0.0
        %919 = vmatprep.subr.mxu0 0.0
        %920 = vmatpush1.msra.mxu0 0.0
        %921 = vmatprep.subr.mxu0 0.0
        %922 = vmatpush1.msra.mxu0 0.0
        %923 = vmatprep.subr.mxu0 0.0
        %924 = vmatpush1.msra.mxu0 0.0
        %925 = vmatprep.subr.mxu0 0.0
        %926 = vmatpush1.msra.mxu0 0.0
        %927 = vmatprep.subr.mxu0 0.0
        %928 = vmatpush1.msra.mxu0 0.0
        %929 = vmatprep.subr.mxu0 0.0
        %930 = vmatpush1.msra.mxu0 0.0
        %931 = vmatprep.subr.mxu0 0.0
        %932 = vmatpush1.msra.mxu0 0.0
        %933 = vmatprep.subr.mxu0 0.0
        %934 = vmatpush1.msra.mxu0 0.0
        %935 = vmatprep.subr.mxu0 0.0
        %936 = vmatpush1.msra.mxu0 0.0
        %937 = vmatprep.subr.mxu0 0.0
        %938 = vmatpush1.msra.mxu0 0.0
        %939 = vmatprep.subr.mxu0 0.0
        %940 = vmatpush1.msra.mxu0 0.0
        %941 = vmatprep.subr.mxu0 0.0
        %942 = vmatpush1.msra.mxu0 0.0
        %943 = vmatprep.subr.mxu0 0.0
        %944 = vmatpush1.msra.mxu0 0.0
        %945 = vmatprep.subr.mxu0 0.0
        %946 = vmatpush1.msra.mxu0 0.0
        %947 = vmatprep.subr.mxu0 0.0
        %948 = vmatpush1.msra.mxu0 0.0
        %949 = vmatprep.subr.mxu0 0.0
        %950 = vmatpush1.msra.mxu0 0.0
        %951 = vmatprep.subr.mxu0 0.0
        %952 = vmatpush1.msra.mxu0 0.0
        %953 = vmatprep.subr.mxu0 0.0
        %954 = vmatpush1.msra.mxu0 0.0
        %955 = vmatprep.mubr.f32.mxu0 0.0
        %956 = vmatmul.mubr.f32.gmra.mrb[0].mxu0 %v886
        %v957 = vpop.f32.mrb[0].mxu0
        %v958 = vadd.f32 0.0, %v957
        %v959 = vpop.f32.mrb[0].mxu0
        %960 = vmatprep.mubr.f32.mxu0 0.0
        %961 = vmatmul.mubr.f32.gmra.mrb[0].mxu0 %v889
        %v962 = vpop.f32.mrb[0].mxu0
        %v963 = vadd.f32 0.0, %v962
        %v964 = vpop.f32.mrb[0].mxu0
        %965 = vdwg.mxu0
        %v967 = vsel %vm528, %v873, 0
        %v970 = vsel %vm528, %v874, 0
        %972 = vmatprep.subr.mxu0 0.0
        %973 = vmatpush1.msra.mxu0 %v877
        %974 = vmatprep.subr.mxu0 0.0
        %975 = vmatpush1.msra.mxu0 %v878
        %976 = vmatprep.subr.mxu0 0.0
        %977 = vmatpush1.msra.mxu0 %v879
        %978 = vmatprep.subr.mxu0 0.0
        %979 = vmatpush1.msra.mxu0 %v880
        %980 = vmatprep.subr.mxu0 0.0
        %981 = vmatpush1.msra.mxu0 0.0
        %982 = vmatprep.subr.mxu0 0.0
        %983 = vmatpush1.msra.mxu0 0.0
        %984 = vmatprep.subr.mxu0 0.0
        %985 = vmatpush1.msra.mxu0 0.0
        %986 = vmatprep.subr.mxu0 0.0
        %987 = vmatpush1.msra.mxu0 0.0
        %988 = vmatprep.subr.mxu0 0.0
        %989 = vmatpush1.msra.mxu0 0.0
        %990 = vmatprep.subr.mxu0 0.0
        %991 = vmatpush1.msra.mxu0 0.0
        %992 = vmatprep.subr.mxu0 0.0
        %993 = vmatpush1.msra.mxu0 0.0
        %994 = vmatprep.subr.mxu0 0.0
        %995 = vmatpush1.msra.mxu0 0.0
        %996 = vmatprep.subr.mxu0 0.0
        %997 = vmatpush1.msra.mxu0 0.0
        %998 = vmatprep.subr.mxu0 0.0
        %999 = vmatpush1.msra.mxu0 0.0
        %1000 = vmatprep.subr.mxu0 0.0
        %1001 = vmatpush1.msra.mxu0 0.0
        %1002 = vmatprep.subr.mxu0 0.0
        %1003 = vmatpush1.msra.mxu0 0.0
        %1004 = vmatprep.subr.mxu0 0.0
        %1005 = vmatpush1.msra.mxu0 0.0
        %1006 = vmatprep.subr.mxu0 0.0
        %1007 = vmatpush1.msra.mxu0 0.0
        %1008 = vmatprep.subr.mxu0 0.0
        %1009 = vmatpush1.msra.mxu0 0.0
        %1010 = vmatprep.subr.mxu0 0.0
        %1011 = vmatpush1.msra.mxu0 0.0
        %1012 = vmatprep.subr.mxu0 0.0
        %1013 = vmatpush1.msra.mxu0 0.0
        %1014 = vmatprep.subr.mxu0 0.0
        %1015 = vmatpush1.msra.mxu0 0.0
        %1016 = vmatprep.subr.mxu0 0.0
        %1017 = vmatpush1.msra.mxu0 0.0
        %1018 = vmatprep.subr.mxu0 0.0
        %1019 = vmatpush1.msra.mxu0 0.0
        %1020 = vmatprep.subr.mxu0 0.0
        %1021 = vmatpush1.msra.mxu0 0.0
        %1022 = vmatprep.subr.mxu0 0.0
        %1023 = vmatpush1.msra.mxu0 0.0
        %1024 = vmatprep.subr.mxu0 0.0
        %1025 = vmatpush1.msra.mxu0 0.0
        %1026 = vmatprep.subr.mxu0 0.0
        %1027 = vmatpush1.msra.mxu0 0.0
        %1028 = vmatprep.subr.mxu0 0.0
        %1029 = vmatpush1.msra.mxu0 0.0
        %1030 = vmatprep.subr.mxu0 0.0
        %1031 = vmatpush1.msra.mxu0 0.0
        %1032 = vmatprep.subr.mxu0 0.0
        %1033 = vmatpush1.msra.mxu0 0.0
        %1034 = vmatprep.subr.mxu0 0.0
        %1035 = vmatpush1.msra.mxu0 0.0
        %1036 = vmatprep.mubr.f32.mxu0 0.0
        %1037 = vmatmul.mubr.f32.gmra.mrb[0].mxu0 %v967
        %v1038 = vpop.f32.mrb[0].mxu0
        %v1039 = vadd.f32 %v958, %v1038
        %v1040 = vpop.f32.mrb[0].mxu0
        %1041 = vmatprep.mubr.f32.mxu0 0.0
        %1042 = vmatmul.mubr.f32.gmra.mrb[0].mxu0 %v970
        %v1043 = vpop.f32.mrb[0].mxu0
        %v1044 = vadd.f32 %v963, %v1043
        %v1045 = vpop.f32.mrb[0].mxu0
        %1046 = vdwg.mxu0
        %v1047 = vld [vmem:[%s11] sm:$0x1]
        %v1049 = vlaneseq
        %v1050 = vshrl.u32 %v1049, 7
        %v1051 = vsub.s32 0, %v1050
        %v1052 = vrot.slane %v1047, %v1051
        %v1054 = vadd.f32 %v1039, %v1052
        %v1055 = vadd.f32 %v1044, %v1052
        %1056 = vst.msk [vmem:[%s406] sm:$0xff] %vm528, %v1054
        %1057 = vst.msk [vmem:[%s406 + $0x8] sm:$0xff] %vm528, %v1055
        %s1058 = sand.u32 %s291, 1
        %s1059 = scalar_lea.sflag [#allocation3], %s1058
        %s1060 = sand.u32 %s291, 1
        %s1061 = smul.addr %s1060, 16
        %s1062 = scalar_lea.vmem [#allocation2], %s1061
        // Predicated region
        $region69: #{message_gnn_layer_forward.1} parent=67 // pred_check
          %p1063 = pneg %p301
        $region70: #{message_gnn_layer_forward.1} parent=67 // pred_check_branch
          %1065 = sbr.rel (%p1063) target = $region72
        $region71: #{message_gnn_layer_forward.1} parent=67 // pred_region
          %s1067 = ssub.s32 256, 256
          %1068 = vsyncadd %s1059, %s1067
          %s1069 = smul.addr %s26, 2
          %s1070 = smul.addr %s1069, 128
          %s1071 = scalar_lea.hbm %s12, %s1070
          %s1072 = sshll.u32 %s1062, 4
          %s1073 = int_to_ptr.vmem [resolvable:$true] %s1072
          %1078 = dma.vmem_to_hbm [thread:$0]  %s1073, 256, %s1071, %s1059, 128, 128, 8
        $region72: #{message_gnn_layer_forward.1} parent=67 // pred_fallthru
          _
      $region68: #{message_gnn_layer_forward.1} parent=5 // pred_fallthru
        _
      %p1079 = scmp.le.s32.totalorder 2, %s21
      // Predicated region
      $region73: #{message_gnn_layer_forward.1} parent=5 // pred_check
        %p1080 = pneg %p1079
      $region74: #{message_gnn_layer_forward.1} parent=5 // pred_check_branch
        %1082 = sbr.rel (%p1080) target = $region76
      $region75: #{message_gnn_layer_forward.1} parent=5 // pred_region
        %s1083 = ssub.s32 %s21, 2
        // Predicated region
        $region77: #{message_gnn_layer_forward.1} parent=75 // pred_check
          %p1084 = pneg %p307
        $region78: #{message_gnn_layer_forward.1} parent=75 // pred_check_branch
          %1086 = sbr.rel (%p1084) target = $region80
        $region79: #{message_gnn_layer_forward.1} parent=75 // pred_region
          %s1087 = sand.u32 %s292, 1
          %s1088 = scalar_lea.sflag [#allocation3], %s1087
          %s1089 = sand.u32 %s292, 1
          %s1090 = smul.addr %s1089, 16
          %s1091 = scalar_lea.vmem [#allocation2], %s1090
          %1092 = dma.done %s1088, 256
        $region80: #{message_gnn_layer_forward.1} parent=75 // pred_fallthru
          _
      $region76: #{message_gnn_layer_forward.1} parent=5 // pred_fallthru
        _
    $region6: #{message_gnn_layer_forward.1} parent=1 // loop_footer
      %s25 = sadd.s32 1, %s21
    $region7: #{message_gnn_layer_forward.1} parent=1 // loop_footer_branch
      %20 = sbr.rel target = $region3
    $region8: #{message_gnn_layer_forward.1} parent=1 // loop_exit
      _
    %1093 = vsyncpa [#allocation3], 1
    %s1094 = scalar_lea.sflag [#allocation3], 1
    %1095 = vsyncpa %s1094, 1

</llo_original>
